<compile_context>
chip_gen: v6e
topology: v6e:2x2x1
jax: 0.10.0
libtpu: 0.0.40
codegen_flags: <defaults>
</compile_context>

<pallas_src>
import jax
import jax.numpy as jnp
from jax.experimental import pallas as pl
from jax.experimental.pallas import tpu as pltpu


def _zero_kernel(x_ref, o_ref):
    # Keep the dependency on x so semantics match torch's x.mul(0.0) exactly
    # (NaN * 0 = NaN, +/-inf * 0 = NaN). The multiply is one VALU op per vreg
    # and is completely hidden under the HBM-bound DMA/store traffic.
    o_ref[...] = x_ref[...] * jnp.array(0.0, dtype=x_ref.dtype)


_LANE = 128
_MAX_COLS = 1024          # lane-dense output width (multiple of 128)
_MAX_ROWS_PER_TILE = 512  # (in+out) x 2 buffers of (512,1024) f32 = 8 MiB


def _lane_dense_cols(total):
    for cols in (_MAX_COLS, 512, 256, _LANE):
        if total % cols == 0:
            return cols
    return None


def zero_forward(x):
    """Pallas equivalent of Zero.forward(x) == x.mul(0.0)."""
    orig_shape = x.shape
    total = int(x.size)
    if total == 0:
        return x * jnp.array(0.0, dtype=x.dtype)

    cols = _lane_dense_cols(total)
    if cols is None:
        # TODO(synk): flat sizes not divisible by 128 fall back to a single
        # whole-array block (correct, un-tiled); fine for small ragged shapes.
        x2 = x.reshape(1, total) if x.ndim < 2 else x.reshape(-1, x.shape[-1])
        rows, c = x2.shape
        out = pl.pallas_call(
            _zero_kernel,
            out_shape=jax.ShapeDtypeStruct((rows, c), x.dtype),
            grid_spec=pl.GridSpec(
                grid=(1,),
                in_specs=[pl.BlockSpec((rows, c), lambda i: (0, 0))],
                out_specs=pl.BlockSpec((rows, c), lambda i: (0, 0)),
            ),
        )(x2)
        return out.reshape(orig_shape)

    rows = total // cols
    x2 = x.reshape(rows, cols)

    # Tile rows; block dims are either a multiple of 8 (tm=512) or the full
    # row extent, so the (8,128) constraint is always satisfied. Partial last
    # tiles are handled by Pallas' OOB masking via pl.cdiv.
    tm = rows if rows <= _MAX_ROWS_PER_TILE else _MAX_ROWS_PER_TILE
    grid = (pl.cdiv(rows, tm),)

    itemsize = jnp.dtype(x.dtype).itemsize
    out = pl.pallas_call(
        _zero_kernel,
        out_shape=jax.ShapeDtypeStruct((rows, cols), x.dtype),
        grid_spec=pl.GridSpec(
            grid=grid,
            in_specs=[pl.BlockSpec((tm, cols), lambda i: (i, 0))],
            out_specs=pl.BlockSpec((tm, cols), lambda i: (i, 0)),
        ),
        compiler_params=pltpu.CompilerParams(
            dimension_semantics=("parallel",),
        ),
        cost_estimate=pl.CostEstimate(
            flops=total,
            transcendentals=0,
            bytes_accessed=2 * total * itemsize,
        ),
    )(x2)
    return out.reshape(orig_shape)


if __name__ == "__main__":
    key = jax.random.PRNGKey(0)
    # NCHW input, consistent with typical NAS cell inputs.
    x = jax.random.normal(key, (2, 4, 16, 16), dtype=jnp.float32)

    y = zero_forward(x)
    jax.block_until_ready(y)

    assert y.shape == x.shape
    assert y.dtype == x.dtype
    assert bool(jnp.all(y == 0.0))
    print("KERNEL_OK")
</pallas_src>

<mosaic_0001>
module attributes {stable_mosaic.version = 11 : i64} {
  func.func @_zero_kernel(%arg0: i32, %arg1: memref<2x1024xf32, #tpu.memory_space<vmem>>, %arg2: memref<2x1024xf32, #tpu.memory_space<vmem>>) attributes {dimension_semantics = [#tpu.dimension_semantics<parallel>], iteration_bounds = array<i64: 1>, scalar_prefetch = 0 : i64, scratch_operands = 0 : i64, tpu.core_type = #tpu.core_type<tc>, window_params = [{transform_indices = @transform_0, window_bounds = array<i64: 2, 1024>}, {transform_indices = @transform_1, window_bounds = array<i64: 2, 1024>}]} {
    %c0 = arith.constant 0 : index
    %c0_0 = arith.constant 0 : index
    %0 = vector.load %arg1[%c0, %c0_0] : memref<2x1024xf32, #tpu.memory_space<vmem>>, vector<2x1024xf32>
    %cst = arith.constant 0.000000e+00 : f32
    %1 = vector.broadcast %cst : f32 to vector<2x1024xf32>
    %2 = arith.mulf %0, %1 : vector<2x1024xf32>
    %c0_1 = arith.constant 0 : index
    %c0_2 = arith.constant 0 : index
    %3 = vector.load %arg2[%c0_1, %c0_2] : memref<2x1024xf32, #tpu.memory_space<vmem>>, vector<2x1024xf32>
    tpu.vector_store %arg2[%c0_1, %c0_2], %2 {strides = array<i32>} : memref<2x1024xf32, #tpu.memory_space<vmem>>, vector<2x1024xf32>,
    return
  }
  func.func @transform_0(%arg0: i32) -> (i32, i32) {
    %c0_i32 = arith.constant 0 : i32
    %c0_i32_0 = arith.constant 0 : i32
    return %arg0, %c0_i32 : i32, i32
  }
  func.func @transform_1(%arg0: i32) -> (i32, i32) {
    %c0_i32 = arith.constant 0 : i32
    %c0_i32_0 = arith.constant 0 : i32
    return %arg0, %c0_i32 : i32, i32
  }
}

</mosaic_0001>

<llo_original>
// kernel: tpu_custom_call.1
$region0: #{tpu_custom_call.1}
  #allocation0 [shape = 'u32[]', space=smem, size = 0x4, offset = 0x4, fixed_abs, tag = 'smem constant byte address 0x4 - core index']
  #allocation1 [shape = 'u32[144,128]{1,0:T(1,128)}', space=vmem, size = 0x12000, scoped, tag = 'internal scratch']
  %s0 = inlined_call_operand.hbm [shape: f32[2,1024], index: 0, kind: input, shape index: {}]
  %s1 = inlined_call_operand.hbm [shape: f32[2,1024], index: 1, kind: output, shape index: {}]
  %s2 = sld [smem:[#allocation0]]
  $region18: #{tpu_custom_call.1} parent=0
    _
  %s4 = ssub.s32 1, %s2
  %s5 = scalar_select 0, %s4, %s2
  $region1: #{tpu_custom_call.1} parent=0
    #allocation2 [shape = 'u8[8192]{0}', space=vmem, size = 0x2000, scoped, tag = 'input window, operand 0, single buffered']
    #allocation3 [shape = 's32[1]{0}', space=sflag, size = 0x4, scoped, tag = 'scoped memory for tpu_custom_call.1']
    #allocation4 [shape = 's32[1]{0}', space=sflag, size = 0x4, scoped, tag = 'scoped memory for tpu_custom_call.1']
    #allocation5 [shape = 'u8[8192]{0}', space=vmem, size = 0x2000, scoped, tag = 'output window, operand 0, single buffered']
    %6 = vsyncpa [#allocation3], 0
    %7 = vsyncpa [#allocation4], 0
    // Predicated region
    $region2: #{tpu_custom_call.1} parent=1 // pred_check
      _
    $region3: #{tpu_custom_call.1} parent=1 // pred_check_branch
      %9 = sbr.rel (0) target = $region5
    $region4: #{tpu_custom_call.1} parent=1 // pred_region
      %s11 = ssub.s32 256, 256
      %12 = vsyncadd [#allocation3], %s11
      %s14 = sshll.u32 [#allocation2], 4
      %s15 = int_to_ptr.vmem [resolvable:$true] %s14
      %17 = dma.hbm_to_vmem [thread:$0]  %s0, 256, %s15, [#allocation3]
    $region5: #{tpu_custom_call.1} parent=1 // pred_fallthru
      _
    // Predicated region
    $region6: #{tpu_custom_call.1} parent=1 // pred_check
      _
    $region7: #{tpu_custom_call.1} parent=1 // pred_check_branch
      %19 = sbr.rel (0) target = $region9
    $region8: #{tpu_custom_call.1} parent=1 // pred_region
      %20 = dma.done [#allocation3], 256
    $region9: #{tpu_custom_call.1} parent=1 // pred_fallthru
      _
    %v21 = vld [vmem:[#allocation2] sm:$0xff]
    %v22 = vld [vmem:[#allocation2 + $0x8] sm:$0xff]
    %v23 = vmul.f32 %v21, 0.0
    %v24 = vmul.f32 %v22, 0.0
    %25 = vst [vmem:[#allocation5] sm:$0xff] %v23
    %26 = vst [vmem:[#allocation5 + $0x8] sm:$0xff] %v24
    // Predicated region
    $region10: #{tpu_custom_call.1} parent=1 // pred_check
      _
    $region11: #{tpu_custom_call.1} parent=1 // pred_check_branch
      %28 = sbr.rel (0) target = $region13
    $region12: #{tpu_custom_call.1} parent=1 // pred_region
      %s30 = ssub.s32 256, 256
      %31 = vsyncadd [#allocation4], %s30
      %s33 = sshll.u32 [#allocation5], 4
      %s34 = int_to_ptr.vmem [resolvable:$true] %s33
      %36 = dma.vmem_to_hbm [thread:$0]  %s34, 256, %s1, [#allocation4]
    $region13: #{tpu_custom_call.1} parent=1 // pred_fallthru
      _
    // Predicated region
    $region14: #{tpu_custom_call.1} parent=1 // pred_check
      _
    $region15: #{tpu_custom_call.1} parent=1 // pred_check_branch
      %38 = sbr.rel (0) target = $region17
    $region16: #{tpu_custom_call.1} parent=1 // pred_region
      %39 = dma.done [#allocation4], 256
    $region17: #{tpu_custom_call.1} parent=1 // pred_fallthru
      _
    %40 = vsyncpa [#allocation3], 1
    %41 = vsyncpa [#allocation4], 1

</llo_original>
